<compile_context>
chip_gen: v6e
topology: v6e:2x2x1
jax: 0.10.0
libtpu: 0.0.40
codegen_flags: <defaults>
</compile_context>

<pallas_src>
import math

import jax
import jax.numpy as jnp
from jax.experimental import pallas as pl
from jax.experimental.pallas import tpu as pltpu


_LANE = 128
_MIN_TILE = 512          # lanes; ~85% of HBM roofline plateau for the DMA
_TARGET_STEPS = 8        # >= 3-4 pipelined steps per TensorCore on 2-TC chips


def _resizing_kernel(x_ref, w_ref, shift_ref, o_ref):
    # x_ref:     (B, C_in, T)   block of B images, spatial tile T (NCHW layout)
    # w_ref:     (C_out, C_in)  1x1-conv weight with folded BN scale
    # shift_ref: (C_out, 1)     folded BN shift = beta - mean * scale (f32)
    # o_ref:     (B, C_out, T)
    w = w_ref[...]
    shift = shift_ref[...]
    for b in range(x_ref.shape[0]):                      # static unroll, B is small
        x = jnp.maximum(x_ref[b], 0)                     # ReLU (VPU)
        y = jnp.dot(w, x, preferred_element_type=jnp.float32)   # (C_out, T) MXU
        o_ref[b] = (y + shift).astype(o_ref.dtype)


def _round_up(v, m):
    return -(-v // m) * m


def _vmem_config():
    """Generation-aware (working-set budget, scoped vmem limit) in bytes."""
    cap = 64 * 1024 * 1024                     # conservative default (v7x per-TC)
    try:
        info = pltpu.get_tpu_info()
        cap = int(getattr(info, "vmem_capacity_bytes", cap)) or cap
    except Exception:
        pass
    if cap >= 100 * 1024 * 1024:               # v5e / v6e: 128 MiB physical VMEM
        return 28 * 1024 * 1024, 64 * 1024 * 1024
    return 22 * 1024 * 1024, 48 * 1024 * 1024  # v7x: 64 MiB per TensorCore


def _choose_tiling(N, HW, C_in, C_out, x_itemsize):
    """Pick (B_N images/block, spatial tile t_hw, vmem_limit_bytes)."""
    budget, vmem_limit = _vmem_config()
    # Weight + shift live single-buffered in VMEM; subtract them from the budget.
    const_bytes = C_out * C_in * x_itemsize + C_out * 4
    avail = max(budget - const_bytes, 4 * 1024 * 1024)

    if HW <= _MIN_TILE:
        t_hw = HW                                      # whole spatial extent per block
    else:
        per_col = 2 * (C_in + C_out) * x_itemsize      # double-buffered in+out / column
        t = max(_MIN_TILE, (avail // per_col) // _LANE * _LANE)
        # Cap the tile so the grid has enough steps to software-pipeline (and so
        # both v7x TensorCores get balanced work), but never drop below the
        # ~512-lane DMA-efficiency plateau.
        if N * pl.cdiv(HW, t) < _TARGET_STEPS:
            steps_per_img = pl.cdiv(_TARGET_STEPS, N)
            t = min(t, max(_MIN_TILE, _round_up(pl.cdiv(HW, steps_per_img), _LANE)))
        t_hw = HW if t >= HW else t

    # Batch several images per block when HW is small so tiny DMAs and the
    # per-grid-step overhead are amortized.
    b_n = 1
    if t_hw == HW and N > 1:
        per_image = (C_in + C_out) * HW * x_itemsize           # one buffer set / image
        b_target = pl.cdiv(1 * 1024 * 1024, max(per_image, 1)) # aim for >= ~1 MiB blocks
        b_steps = max(1, pl.cdiv(N, 4))                        # keep >= ~4 grid steps
        b_vmem = max(1, avail // max(2 * per_image, 1))        # double-buffered blocks
        b_n = max(1, min(N, b_target, b_steps, b_vmem))
    return b_n, t_hw, vmem_limit


def _resizing_matmul(x, w_eff, shift, *, b_n, t_hw, vmem_limit):
    # x: (N, C_in, HW)   w_eff: (C_out, C_in)   shift: (C_out, 1) f32
    N, C_in, HW = x.shape
    C_out = w_eff.shape[0]
    grid = (pl.cdiv(N, b_n), pl.cdiv(HW, t_hw))

    def build(single_buffer_consts):
        const_kwargs = (
            dict(pipeline_mode=pl.Buffered(1)) if single_buffer_consts else {}
        )
        return pl.pallas_call(
            _resizing_kernel,
            out_shape=jax.ShapeDtypeStruct((N, C_out, HW), x.dtype),
            grid_spec=pltpu.PrefetchScalarGridSpec(
                num_scalar_prefetch=0,
                grid=grid,
                in_specs=[
                    pl.BlockSpec((b_n, C_in, t_hw), lambda n, j: (n, 0, j)),
                    # Grid-constant operands: single buffer (index never changes).
                    pl.BlockSpec((C_out, C_in), lambda n, j: (0, 0), **const_kwargs),
                    pl.BlockSpec((C_out, 1), lambda n, j: (0, 0), **const_kwargs),
                ],
                out_specs=pl.BlockSpec((b_n, C_out, t_hw), lambda n, j: (n, 0, j)),
            ),
            compiler_params=pltpu.CompilerParams(
                dimension_semantics=("parallel", "parallel"),
                vmem_limit_bytes=vmem_limit,
            ),
        )

    try:
        return build(True)(x, w_eff, shift)
    except Exception:
        # TODO(synk): pl.Buffered(1) not accepted by this JAX version; fall back
        # to default double-buffered constant operands (correct, slightly more VMEM).
        return build(False)(x, w_eff, shift)


class ResizingPallas:
    """JAX/Pallas equivalent of the PyTorch Resizing module (eval-mode BN)."""

    def __init__(self, C_in, C_out, affine=True, key=None, *,
                 weight=None, gamma=None, beta=None,
                 running_mean=None, running_var=None, eps=1e-5):
        self.C_in = C_in
        self.C_out = C_out
        if C_in == C_out:
            return

        # Conv2d(C_in, C_out, 1, bias=False) weight (C_out, C_in, 1, 1) -> (C_out, C_in)
        if weight is None:
            if key is None:
                key = jax.random.PRNGKey(0)
            bound = 1.0 / math.sqrt(C_in)
            weight = jax.random.uniform(
                key, (C_out, C_in), minval=-bound, maxval=bound, dtype=jnp.float32)
        else:
            weight = jnp.asarray(weight, jnp.float32).reshape(C_out, C_in)

        # BatchNorm2d(C_out, affine=affine), eval-mode fold.
        if gamma is None or not affine:
            gamma = jnp.ones((C_out,), jnp.float32)
        if beta is None or not affine:
            beta = jnp.zeros((C_out,), jnp.float32)
        if running_mean is None:
            running_mean = jnp.zeros((C_out,), jnp.float32)
        if running_var is None:
            running_var = jnp.ones((C_out,), jnp.float32)
        gamma = jnp.asarray(gamma, jnp.float32)
        beta = jnp.asarray(beta, jnp.float32)
        running_mean = jnp.asarray(running_mean, jnp.float32)
        running_var = jnp.asarray(running_var, jnp.float32)

        scale = gamma / jnp.sqrt(running_var + eps)
        self.w_eff = weight * scale[:, None]                    # (C_out, C_in)
        self.shift = (beta - running_mean * scale).reshape(C_out, 1)

    def __call__(self, x):
        # x: (N, C_in, H, W) NCHW (PyTorch convention)
        if self.C_in == self.C_out:
            return x
        N, C, H, W = x.shape
        assert C == self.C_in
        HW = H * W
        x_r = x.reshape(N, C, HW)                               # free (contiguous)
        itemsize = jnp.dtype(x.dtype).itemsize
        b_n, t_hw, vmem_limit = _choose_tiling(N, HW, self.C_in, self.C_out, itemsize)
        w = self.w_eff.astype(x.dtype)      # bf16 activations keep f32 accumulation
        y = _resizing_matmul(x_r, w, self.shift, b_n=b_n, t_hw=t_hw,
                             vmem_limit=vmem_limit)
        return y.reshape(N, self.C_out, H, W)                   # free (contiguous)


def _reference(x, w_eff, shift):
    # Pure-JAX reference of ReLU -> 1x1 conv (folded BN scale) -> + shift.
    N, C, H, W = x.shape
    xr = jnp.maximum(x, 0.0).astype(jnp.float32).reshape(N, C, H * W)
    y = jnp.einsum("oc,ncs->nos", w_eff.astype(jnp.float32), xr,
                   precision=jax.lax.Precision.HIGHEST) + shift[None]
    return y.reshape(N, w_eff.shape[0], H, W).astype(x.dtype)


if __name__ == "__main__":
    key = jax.random.PRNGKey(0)
    k_x, k_w, k_g, k_b, k_m, k_v, k_x2 = jax.random.split(key, 7)

    # Case 1: channel resize with non-trivial BN statistics.
    N, C_in, C_out, H, W = 2, 4, 8, 16, 16
    x = jax.random.normal(k_x, (N, C_in, H, W), dtype=jnp.float32)
    mod = ResizingPallas(
        C_in, C_out, affine=True, key=k_w,
        gamma=1.0 + 0.1 * jax.random.normal(k_g, (C_out,)),
        beta=0.1 * jax.random.normal(k_b, (C_out,)),
        running_mean=0.1 * jax.random.normal(k_m, (C_out,)),
        running_var=1.0 + 0.1 * jax.random.uniform(k_v, (C_out,)),
    )
    out = jax.block_until_ready(mod(x))
    ref = _reference(x, mod.w_eff, mod.shift)
    assert out.shape == (N, C_out, H, W)
    assert jnp.allclose(out, ref, atol=2e-2, rtol=2e-2)

    # Case 2: small spatial extent -> multi-image blocks (B_N > 1 path).
    N2, C_in2, C_out2, H2, W2 = 8, 8, 16, 8, 8
    x2 = jax.random.normal(k_x2, (N2, C_in2, H2, W2), dtype=jnp.float32)
    mod2 = ResizingPallas(C_in2, C_out2, key=k_w)
    out2 = jax.block_until_ready(mod2(x2))
    ref2 = _reference(x2, mod2.w_eff, mod2.shift)
    assert out2.shape == (N2, C_out2, H2, W2)
    assert jnp.allclose(out2, ref2, atol=2e-2, rtol=2e-2)

    # Identity path (C_in == C_out).
    mod_id = ResizingPallas(C_in, C_in)
    out_id = jax.block_until_ready(mod_id(x))
    assert jnp.array_equal(out_id, x)

    print("KERNEL_OK")
</pallas_src>

<mosaic_0001>
module attributes {stable_mosaic.version = 11 : i64} {
  func.func @_resizing_kernel(%arg0: i32, %arg1: i32, %arg2: memref<1x4x256xf32, #tpu.memory_space<vmem>>, %arg3: memref<8x4xf32, #tpu.memory_space<vmem>>, %arg4: memref<8x1xf32, #tpu.memory_space<vmem>>, %arg5: memref<1x8x256xf32, #tpu.memory_space<vmem>>) attributes {dimension_semantics = [#tpu.dimension_semantics<parallel>, #tpu.dimension_semantics<parallel>], iteration_bounds = array<i64: 2, 1>, scalar_prefetch = 0 : i64, scratch_operands = 0 : i64, tpu.core_type = #tpu.core_type<tc>, window_params = [{transform_indices = @transform_0, window_bounds = array<i64: 1, 4, 256>}, {pipeline_mode = #tpu.pipeline_mode<synchronous>, transform_indices = @transform_1, window_bounds = array<i64: 8, 4>}, {pipeline_mode = #tpu.pipeline_mode<synchronous>, transform_indices = @transform_2, window_bounds = array<i64: 8, 1>}, {transform_indices = @transform_3, window_bounds = array<i64: 1, 8, 256>}]} {
    %c0 = arith.constant 0 : index
    %c0_0 = arith.constant 0 : index
    %0 = vector.load %arg3[%c0, %c0_0] : memref<8x4xf32, #tpu.memory_space<vmem>>, vector<8x4xf32>
    %c0_1 = arith.constant 0 : index
    %c0_2 = arith.constant 0 : index
    %1 = vector.load %arg4[%c0_1, %c0_2] : memref<8x1xf32, #tpu.memory_space<vmem>>, vector<8x1xf32>
    %c0_3 = arith.constant 0 : index
    %c0_4 = arith.constant 0 : index
    %c0_5 = arith.constant 0 : index
    %2 = vector.load %arg2[%c0_3, %c0_4, %c0_5] : memref<1x4x256xf32, #tpu.memory_space<vmem>>, vector<1x4x256xf32>
    %3 = vector.shape_cast %2 : vector<1x4x256xf32> to vector<4x256xf32>
    %cst = arith.constant 0.000000e+00 : f32
    %4 = vector.broadcast %cst : f32 to vector<4x256xf32>
    %5 = arith.maximumf %3, %4 : vector<4x256xf32>
    %cst_6 = arith.constant dense<0.000000e+00> : vector<8x256xf32>
    %6 = tpu.matmul %0, %5, %cst_6 {dimension_numbers = #tpu.dot_dimension_numbers<[1], [0], [0], [1], [0, 0, 1, 1], [], []>} : vector<8x4xf32>, vector<4x256xf32>, vector<8x256xf32> -> vector<8x256xf32>
    %7 = vector.broadcast %1 : vector<8x1xf32> to vector<8x256xf32>
    %8 = arith.addf %6, %7 : vector<8x256xf32>
    %c0_7 = arith.constant 0 : index
    %c0_8 = arith.constant 0 : index
    %c0_9 = arith.constant 0 : index
    %9 = vector.load %arg5[%c0_7, %c0_8, %c0_9] : memref<1x8x256xf32, #tpu.memory_space<vmem>>, vector<1x8x256xf32>
    %10 = vector.shape_cast %9 : vector<1x8x256xf32> to vector<8x256xf32>
    %11 = vector.shape_cast %8 : vector<8x256xf32> to vector<1x8x256xf32>
    tpu.vector_store %arg5[%c0_7, %c0_8, %c0_9], %11 {strides = array<i32>} : memref<1x8x256xf32, #tpu.memory_space<vmem>>, vector<1x8x256xf32>,
    return
  }
  func.func @transform_0(%arg0: i32, %arg1: i32) -> (i32, i32, i32) {
    %c0_i32 = arith.constant 0 : i32
    %c0_i32_0 = arith.constant 0 : i32
    return %arg0, %c0_i32, %arg1 : i32, i32, i32
  }
  func.func @transform_1(%arg0: i32, %arg1: i32) -> (i32, i32) {
    %c0_i32 = arith.constant 0 : i32
    %c0_i32_0 = arith.constant 0 : i32
    %c0_i32_1 = arith.constant 0 : i32
    return %c0_i32, %c0_i32_0 : i32, i32
  }
  func.func @transform_2(%arg0: i32, %arg1: i32) -> (i32, i32) {
    %c0_i32 = arith.constant 0 : i32
    %c0_i32_0 = arith.constant 0 : i32
    %c0_i32_1 = arith.constant 0 : i32
    return %c0_i32, %c0_i32_0 : i32, i32
  }
  func.func @transform_3(%arg0: i32, %arg1: i32) -> (i32, i32, i32) {
    %c0_i32 = arith.constant 0 : i32
    %c0_i32_0 = arith.constant 0 : i32
    return %arg0, %c0_i32, %arg1 : i32, i32, i32
  }
}

module attributes {stable_mosaic.version = 11 : i64} {
  func.func @_resizing_kernel(%arg0: i32, %arg1: i32, %arg2: memref<1x4x256xf32, #tpu.memory_space<vmem>>, %arg3: memref<8x4xf32, #tpu.memory_space<vmem>>, %arg4: memref<8x1xf32, #tpu.memory_space<vmem>>, %arg5: memref<1x8x256xf32, #tpu.memory_space<vmem>>) attributes {dimension_semantics = [#tpu.dimension_semantics<parallel>, #tpu.dimension_semantics<parallel>], iteration_bounds = array<i64: 2, 1>, scalar_prefetch = 0 : i64, scratch_operands = 0 : i64, tpu.core_type = #tpu.core_type<tc>, window_params = [{transform_indices = @transform_0, window_bounds = array<i64: 1, 4, 256>}, {pipeline_mode = #tpu.pipeline_mode<synchronous>, transform_indices = @transform_1, window_bounds = array<i64: 8, 4>}, {pipeline_mode = #tpu.pipeline_mode<synchronous>, transform_indices = @transform_2, window_bounds = array<i64: 8, 1>}, {transform_indices = @transform_3, window_bounds = array<i64: 1, 8, 256>}]} {
    %c0 = arith.constant 0 : index
    %c0_0 = arith.constant 0 : index
    %0 = vector.load %arg3[%c0, %c0_0] : memref<8x4xf32, #tpu.memory_space<vmem>>, vector<8x4xf32>
    %c0_1 = arith.constant 0 : index
    %c0_2 = arith.constant 0 : index
    %1 = vector.load %arg4[%c0_1, %c0_2] : memref<8x1xf32, #tpu.memory_space<vmem>>, vector<8x1xf32>
    %c0_3 = arith.constant 0 : index
    %c0_4 = arith.constant 0 : index
    %c0_5 = arith.constant 0 : index
    %2 = vector.load %arg2[%c0_3, %c0_4, %c0_5] : memref<1x4x256xf32, #tpu.memory_space<vmem>>, vector<1x4x256xf32>
    %3 = vector.shape_cast %2 : vector<1x4x256xf32> to vector<4x256xf32>
    %cst = arith.constant 0.000000e+00 : f32
    %4 = vector.broadcast %cst : f32 to vector<4x256xf32>
    %5 = arith.maximumf %3, %4 : vector<4x256xf32>
    %cst_6 = arith.constant dense<0.000000e+00> : vector<8x256xf32>
    %6 = tpu.matmul %0, %5, %cst_6 {dimension_numbers = #tpu.dot_dimension_numbers<[1], [0], [0], [1], [0, 0, 1, 1], [], []>} : vector<8x4xf32>, vector<4x256xf32>, vector<8x256xf32> -> vector<8x256xf32>
    %7 = vector.broadcast %1 : vector<8x1xf32> to vector<8x256xf32>
    %8 = arith.addf %6, %7 : vector<8x256xf32>
    %c0_7 = arith.constant 0 : index
    %c0_8 = arith.constant 0 : index
    %c0_9 = arith.constant 0 : index
    %9 = vector.load %arg5[%c0_7, %c0_8, %c0_9] : memref<1x8x256xf32, #tpu.memory_space<vmem>>, vector<1x8x256xf32>
    %10 = vector.shape_cast %9 : vector<1x8x256xf32> to vector<8x256xf32>
    %11 = vector.shape_cast %8 : vector<8x256xf32> to vector<1x8x256xf32>
    tpu.vector_store %arg5[%c0_7, %c0_8, %c0_9], %11 {strides = array<i32>} : memref<1x8x256xf32, #tpu.memory_space<vmem>>, vector<1x8x256xf32>,
    return
  }
  func.func @transform_0(%arg0: i32, %arg1: i32) -> (i32, i32, i32) {
    %c0_i32 = arith.constant 0 : i32
    %c0_i32_0 = arith.constant 0 : i32
    return %arg0, %c0_i32, %arg1 : i32, i32, i32
  }
  func.func @transform_1(%arg0: i32, %arg1: i32) -> (i32, i32) {
    %c0_i32 = arith.constant 0 : i32
    %c0_i32_0 = arith.constant 0 : i32
    %c0_i32_1 = arith.constant 0 : i32
    return %c0_i32, %c0_i32_0 : i32, i32
  }
  func.func @transform_2(%arg0: i32, %arg1: i32) -> (i32, i32) {
    %c0_i32 = arith.constant 0 : i32
    %c0_i32_0 = arith.constant 0 : i32
    %c0_i32_1 = arith.constant 0 : i32
    return %c0_i32, %c0_i32_0 : i32, i32
  }
  func.func @transform_3(%arg0: i32, %arg1: i32) -> (i32, i32, i32) {
    %c0_i32 = arith.constant 0 : i32
    %c0_i32_0 = arith.constant 0 : i32
    return %arg0, %c0_i32, %arg1 : i32, i32, i32
  }
}

</mosaic_0001>

<llo_original>
// kernel: tpu_custom_call.1
$region0: #{tpu_custom_call.1}
  #allocation0 [shape = 'u32[]', space=smem, size = 0x4, offset = 0x4, fixed_abs, tag = 'smem constant byte address 0x4 - core index']
  #allocation1 [shape = 'u32[144,128]{1,0:T(1,128)}', space=vmem, size = 0x12000, scoped, tag = 'internal scratch']
  %s0 = inlined_call_operand.vmem [shape: f32[2,4,256], index: 0, kind: input, shape index: {}]
  %s1 = inlined_call_operand.vmem [shape: f32[8,4], index: 1, kind: input, shape index: {}]
  %s2 = inlined_call_operand.vmem [shape: f32[8,1], index: 2, kind: input, shape index: {}]
  %s3 = inlined_call_operand.hbm [shape: f32[2,8,256], index: 3, kind: output, shape index: {}]
  %s4 = sld [smem:[#allocation0]]
  $region45: #{tpu_custom_call.1} parent=0
    _
  %s6 = ssub.s32 1, %s4
  %s7 = scalar_select 0, %s6, %s4
  $region1: #{tpu_custom_call.1} parent=0
    #allocation2 [shape = 'u8[16384]{0}', space=vmem, size = 0x4000, scoped, tag = 'output window, operand 0']
    #allocation3 [shape = 's32[2]{0}', space=sflag, size = 0x8, scoped, tag = 'scoped memory for tpu_custom_call.1']
    %8 = vsyncpa [#allocation3], 0
    %s9 = scalar_lea.sflag [#allocation3], 1
    %10 = vsyncpa %s9, 0
    loop: start=0, step=1, limit=4
    $region2: #{tpu_custom_call.1} parent=1 // loop_pre_header
      _
    $region3: #{tpu_custom_call.1} parent=1 // loop_header
      %s12 = sphi 0, %s16
      %p13 = scmp.ge.s32.totalorder %s12, 4
      %s19 = sphi 0, %s31
      %s20 = sphi 0, %s27
      %s21 = sphi 0, %s19
      %s22 = sphi 0, %s20
      %s23 = sphi 0, %s21
      %s24 = sphi 0, %s22
      %s36 = sphi 0, %s38
      %s39 = sphi 0, %s36
      %s40 = sphi 0, %s39
      %s56 = sphi 0, %s40
      %s60 = sphi 0, %s60
      %s62 = sphi 0, %s60
      %s63 = sphi 0, %s62
      %s77 = sphi 0, %s63
      %s81 = sphi 0, %s81
      %s83 = sphi 0, %s81
      %s84 = sphi 0, %s83
      %s98 = sphi 0, %s84
      %s106 = sphi 0, %s108
      %s109 = sphi 0, %s106
      %s110 = sphi 0, %s109
      %s126 = sphi 0, %s110
    $region4: #{tpu_custom_call.1} parent=1 // loop_header_branch
      %15 = sbr.rel (%p13) target = $region8
    $region5: #{tpu_custom_call.1} parent=1 // loop_body
      %s17 = ssub.s32 %s12, 1
      %s18 = ssub.s32 %s12, 2
      %s25 = sadd.s32 1, %s20
      %p26 = scmp.ge.s32.totalorder %s25, 1
      %s27 = scalar_select %p26, 0, %s25
      %s28 = sadd.s32 1, %s19
      %s29 = scalar_select %p26, %s28, %s19
      %p30 = scmp.ge.s32.totalorder %s29, 2
      %s31 = scalar_select %p30, 0, %s29
      %s32 = ssub.s32 %s19, %s31
      %s33 = ssub.s32 %s20, %s27
      %s34 = sor.u32 %s32, %s33
      %p35 = scmp.eq.s32.totalorder %s34, 0
      %s37 = sadd.s32 %s36, 1
      %s38 = scalar_select %p35, %s36, %s37
      %p41 = pneg %p35
      %p42 = scmp.eq.s32.totalorder %s12, 1
      %p43 = por %p41, %p42
      %p44 = scmp.ne.s32.totalorder %s36, %s39
      %p45 = scmp.eq.s32.totalorder %s12, 0
      %p46 = por %p44, %p45
      %p47 = scmp.ne.s32.totalorder %s36, %s39
      %p48 = scmp.eq.s32.totalorder %s17, 1
      %p49 = por %p47, %p48
      %p50 = scmp.ne.s32.totalorder %s39, %s40
      %p51 = scmp.eq.s32.totalorder %s17, 0
      %p52 = por %p50, %p51
      %p53 = scmp.ne.s32.totalorder %s39, %s40
      %p54 = scmp.eq.s32.totalorder %s18, 1
      %p55 = por %p53, %p54
      %p57 = scmp.ne.s32.totalorder %s40, %s56
      %p58 = scmp.eq.s32.totalorder %s18, 0
      %p59 = por %p57, %p58
      %s61 = sadd.s32 %s60, 1
      %p64 = scmp.eq.s32.totalorder %s12, 1
      %p65 = scmp.ne.s32.totalorder %s60, %s62
      %p66 = scmp.eq.s32.totalorder %s12, 0
      %p67 = por %p65, %p66
      %p68 = scmp.ne.s32.totalorder %s60, %s62
      %p69 = scmp.eq.s32.totalorder %s17, 1
      %p70 = por %p68, %p69
      %p71 = scmp.ne.s32.totalorder %s62, %s63
      %p72 = scmp.eq.s32.totalorder %s17, 0
      %p73 = por %p71, %p72
      %p74 = scmp.ne.s32.totalorder %s62, %s63
      %p75 = scmp.eq.s32.totalorder %s18, 1
      %p76 = por %p74, %p75
      %p78 = scmp.ne.s32.totalorder %s63, %s77
      %p79 = scmp.eq.s32.totalorder %s18, 0
      %p80 = por %p78, %p79
      %s82 = sadd.s32 %s81, 1
      %p85 = scmp.eq.s32.totalorder %s12, 1
      %p86 = scmp.ne.s32.totalorder %s81, %s83
      %p87 = scmp.eq.s32.totalorder %s12, 0
      %p88 = por %p86, %p87
      %p89 = scmp.ne.s32.totalorder %s81, %s83
      %p90 = scmp.eq.s32.totalorder %s17, 1
      %p91 = por %p89, %p90
      %p92 = scmp.ne.s32.totalorder %s83, %s84
      %p93 = scmp.eq.s32.totalorder %s17, 0
      %p94 = por %p92, %p93
      %p95 = scmp.ne.s32.totalorder %s83, %s84
      %p96 = scmp.eq.s32.totalorder %s18, 1
      %p97 = por %p95, %p96
      %p99 = scmp.ne.s32.totalorder %s84, %s98
      %p100 = scmp.eq.s32.totalorder %s18, 0
      %p101 = por %p99, %p100
      %s102 = ssub.s32 %s19, %s31
      %s103 = ssub.s32 %s20, %s27
      %s104 = sor.u32 %s102, %s103
      %p105 = scmp.eq.s32.totalorder %s104, 0
      %s107 = sadd.s32 %s106, 1
      %s108 = scalar_select %p105, %s106, %s107
      %p111 = pneg %p105
      %p112 = scmp.eq.s32.totalorder %s12, 1
      %p113 = por %p111, %p112
      %p114 = scmp.ne.s32.totalorder %s106, %s109
      %p115 = scmp.eq.s32.totalorder %s12, 0
      %p116 = por %p114, %p115
      %p117 = scmp.ne.s32.totalorder %s106, %s109
      %p118 = scmp.eq.s32.totalorder %s17, 1
      %p119 = por %p117, %p118
      %p120 = scmp.ne.s32.totalorder %s109, %s110
      %p121 = scmp.eq.s32.totalorder %s17, 0
      %p122 = por %p120, %p121
      %p123 = scmp.ne.s32.totalorder %s109, %s110
      %p124 = scmp.eq.s32.totalorder %s18, 1
      %p125 = por %p123, %p124
      %p127 = scmp.ne.s32.totalorder %s110, %s126
      %p128 = scmp.eq.s32.totalorder %s18, 0
      %p129 = por %p127, %p128
      %p130 = scmp.le.s32.totalorder 1, %s12
      %p131 = scmp.lt.s32.totalorder %s12, 3
      %p132 = pnand %p130, %p131
      %p133 = pneg %p132
      // Predicated region
      $region9: #{tpu_custom_call.1} parent=5 // pred_check
        _
      $region10: #{tpu_custom_call.1} parent=5 // pred_check_branch
        %135 = sbr.rel (%p132) target = $region12
      $region11: #{tpu_custom_call.1} parent=5 // pred_region
        %s136 = ssub.s32 %s12, 1
        // Predicated region
        $region13: #{tpu_custom_call.1} parent=11 // pred_check
          %p137 = pneg %p73
        $region14: #{tpu_custom_call.1} parent=11 // pred_check_branch
          %139 = sbr.rel (%p137) target = $region16
        $region15: #{tpu_custom_call.1} parent=11 // pred_region
          _
        $region16: #{tpu_custom_call.1} parent=11 // pred_fallthru
          _
        // Predicated region
        $region17: #{tpu_custom_call.1} parent=11 // pred_check
          %p140 = pneg %p94
        $region18: #{tpu_custom_call.1} parent=11 // pred_check_branch
          %142 = sbr.rel (%p140) target = $region20
        $region19: #{tpu_custom_call.1} parent=11 // pred_region
          _
        $region20: #{tpu_custom_call.1} parent=11 // pred_fallthru
          _
      $region12: #{tpu_custom_call.1} parent=5 // pred_fallthru
        _
      %p143 = scmp.lt.s32.totalorder %s12, 2
      // Predicated region
      $region21: #{tpu_custom_call.1} parent=5 // pred_check
        %p144 = pneg %p143
      $region22: #{tpu_custom_call.1} parent=5 // pred_check_branch
        %146 = sbr.rel (%p144) target = $region24
      $region23: #{tpu_custom_call.1} parent=5 // pred_region
        // Predicated region
        $region25: #{tpu_custom_call.1} parent=23 // pred_check
          %p147 = pneg %p46
        $region26: #{tpu_custom_call.1} parent=23 // pred_check_branch
          %149 = sbr.rel (%p147) target = $region28
        $region27: #{tpu_custom_call.1} parent=23 // pred_region
          %s150 = smul.u32 2, %s20
          %p151 = scmp.lt.s32.totalorder %s19, 1
          %s152 = scalar_select %p151, %s19, 1
          %p153 = scmp.lt.s32.totalorder %s150, 1
          %s154 = scalar_select %p153, %s150, 1
          %s155 = smul.addr %s152, 2
          %s156 = sadd.s32 %s154, %s155
          %s157 = smul.addr %s156, 4
          %s158 = scalar_lea.vmem %s0, %s157
          %s159 = smul.u32 2, %s20
        $region28: #{tpu_custom_call.1} parent=23 // pred_fallthru
          _
      $region24: #{tpu_custom_call.1} parent=5 // pred_fallthru
        _
      %p160 = scmp.le.s32.totalorder 1, %s12
      %p161 = scmp.lt.s32.totalorder %s12, 3
      %p162 = pnand %p160, %p161
      %p163 = pneg %p162
      // Predicated region
      $region29: #{tpu_custom_call.1} parent=5 // pred_check
        _
      $region30: #{tpu_custom_call.1} parent=5 // pred_check_branch
        %165 = sbr.rel (%p162) target = $region32
      $region31: #{tpu_custom_call.1} parent=5 // pred_region
        %s166 = ssub.s32 %s12, 1
        %s167 = smul.u32 2, %s22
        %p168 = scmp.lt.s32.totalorder %s21, 1
        %s169 = scalar_select %p168, %s21, 1
        %p170 = scmp.lt.s32.totalorder %s167, 1
        %s171 = scalar_select %p170, %s167, 1
        %s172 = smul.addr %s169, 2
        %s173 = sadd.s32 %s171, %s172
        %s174 = smul.addr %s173, 4
        %s175 = scalar_lea.vmem %s0, %s174
        %p176 = pneg %p52
        %p177 = pneg %p49
        %p178 = pneg %p73
        %p179 = pneg %p70
        %p180 = pneg %p94
        %p181 = pneg %p91
        %p182 = pneg %p122
        %p183 = pneg %p119
        %s184 = sand.u32 %s109, 1
        %s185 = scalar_lea.sflag [#allocation3], %s184
        %s186 = sand.u32 %s109, 1
        %s187 = smul.addr %s186, 16
        %s188 = scalar_lea.vmem [#allocation2], %s187
        %s189 = smul.u32 2, %s22
        %p190 = scmp.lt.s32.totalorder %s21, 1
        %s191 = scalar_select %p190, %s21, 1
        %p192 = scmp.lt.s32.totalorder %s189, 1
        %s193 = scalar_select %p192, %s189, 1
        %s194 = smul.addr %s191, 2
        %s195 = sadd.s32 %s193, %s194
        %s196 = smul.addr %s195, 4
        %s197 = scalar_lea.vmem %s0, %s196
        %s198 = smul.u32 2, %s22
        %s199 = smul.u32 2, %s22
        %v200 = vld [vmem:[%s1] sm:$0xff]
        %v201 = vld [vmem:[%s2] sm:$0xff]
        %v202 = vld [vmem:[%s197] sm:$0xff]
        %v203 = vmax.f32 %v202, 0.0
        %205 = vset.pattern.permute.xlu0 0
        %206 = vperm.xlu0 %205, %v201
        %v207 = vpop.permute.xlu0 %206
        %v210 = vcombine.high %v203, %v203
        %vm211 = vcmask 31744
        %v213 = vsel %vm211, %v200, 0
        %vm215 = vcmask 1043456
        %v216 = vsel %vm215, %v203, 0
        %v218 = vsel %vm215, %v210, 0
        %220 = vmatprep.subr.mxu0 0.0
        %221 = vmatpush1.msra.mxu0 0.0
        %222 = vmatprep.subr.mxu0 0.0
        %223 = vmatpush1.msra.mxu0 0.0
        %224 = vmatprep.subr.mxu0 0.0
        %225 = vmatpush1.msra.mxu0 0.0
        %226 = vmatprep.subr.mxu0 0.0
        %227 = vmatpush1.msra.mxu0 0.0
        %228 = vmatprep.subr.mxu0 0.0
        %229 = vmatpush1.msra.mxu0 0.0
        %230 = vmatprep.subr.mxu0 0.0
        %231 = vmatpush1.msra.mxu0 0.0
        %232 = vmatprep.subr.mxu0 0.0
        %233 = vmatpush1.msra.mxu0 0.0
        %234 = vmatprep.subr.mxu0 0.0
        %235 = vmatpush1.msra.mxu0 0.0
        %236 = vmatprep.subr.mxu0 0.0
        %237 = vmatpush1.msra.mxu0 0.0
        %238 = vmatprep.subr.mxu0 0.0
        %239 = vmatpush1.msra.mxu0 0.0
        %240 = vmatprep.subr.mxu0 0.0
        %241 = vmatpush1.msra.mxu0 0.0
        %242 = vmatprep.subr.mxu0 0.0
        %243 = vmatpush1.msra.mxu0 0.0
        %244 = vmatprep.subr.mxu0 0.0
        %245 = vmatpush1.msra.mxu0 0.0
        %246 = vmatprep.subr.mxu0 0.0
        %247 = vmatpush1.msra.mxu0 0.0
        %248 = vmatprep.subr.mxu0 0.0
        %249 = vmatpush1.msra.mxu0 0.0
        %250 = vmatprep.subr.mxu0 %v218
        %251 = vmatpush1.msra.mxu0 %v216
        %252 = vmatprep.subr.mxu0 0.0
        %253 = vmatpush2.msra.mxu0 0.0
        %254 = vmatprep.subr.mxu0 0.0
        %255 = vmatpush2.msra.mxu0 0.0
        %256 = vmatprep.subr.mxu0 0.0
        %257 = vmatpush2.msra.mxu0 0.0
        %258 = vmatprep.subr.mxu0 0.0
        %259 = vmatpush2.msra.mxu0 0.0
        %260 = vmatprep.subr.mxu0 0.0
        %261 = vmatpush2.msra.mxu0 0.0
        %262 = vmatprep.subr.mxu0 0.0
        %263 = vmatpush2.msra.mxu0 0.0
        %264 = vmatprep.subr.mxu0 0.0
        %265 = vmatpush2.msra.mxu0 0.0
        %266 = vmatprep.subr.mxu0 0.0
        %267 = vmatpush2.msra.mxu0 0.0
        %268 = vmatprep.subr.mxu0 0.0
        %269 = vmatpush2.msra.mxu0 0.0
        %270 = vmatprep.subr.mxu0 0.0
        %271 = vmatpush2.msra.mxu0 0.0
        %272 = vmatprep.subr.mxu0 0.0
        %273 = vmatpush2.msra.mxu0 0.0
        %274 = vmatprep.subr.mxu0 0.0
        %275 = vmatpush2.msra.mxu0 0.0
        %276 = vmatprep.subr.mxu0 0.0
        %277 = vmatpush2.msra.mxu0 0.0
        %278 = vmatprep.subr.mxu0 0.0
        %279 = vmatpush2.msra.mxu0 0.0
        %280 = vmatprep.subr.mxu0 0.0
        %281 = vmatpush2.msra.mxu0 0.0
        %282 = vmatprep.subr.mxu0 0.0
        %283 = vmatpush2.msra.mxu0 0.0
        %284 = vmatprep.mubr.f32.mxu0 0.0
        %285 = vmatmul.mubr.f32.gmra.mxu0 %v213
        %v286 = vpop.f32.mrf.mxu0
        %v287 = vadd.f32 %v207, %v286
        %v288 = vpop.f32.mrf.mxu0
        %v289 = vadd.f32 %v207, %v288
        %290 = vdwg.mxu0
        %291 = vst [vmem:[%s188] sm:$0xff] %v287
        %292 = vst [vmem:[%s188 + $0x8] sm:$0xff] %v289
        %s293 = sand.u32 %s109, 1
        %s294 = scalar_lea.sflag [#allocation3], %s293
        %s295 = sand.u32 %s109, 1
        %s296 = smul.addr %s295, 16
        %s297 = scalar_lea.vmem [#allocation2], %s296
        // Predicated region
        $region33: #{tpu_custom_call.1} parent=31 // pred_check
          %p298 = pneg %p119
        $region34: #{tpu_custom_call.1} parent=31 // pred_check_branch
          %300 = sbr.rel (%p298) target = $region36
        $region35: #{tpu_custom_call.1} parent=31 // pred_region
          %s301 = smul.u32 2, %s22
          %s303 = ssub.s32 256, 256
          %304 = vsyncadd %s294, %s303
          %s305 = smul.addr %s21, 2
          %s306 = sadd.s32 %s301, %s305
          %s307 = smul.addr %s306, 128
          %s308 = scalar_lea.hbm %s3, %s307
          %s310 = sshll.u32 %s297, 4
          %s311 = int_to_ptr.vmem [resolvable:$true] %s310
          %313 = dma.vmem_to_hbm [thread:$0]  %s311, 256, %s308, %s294
        $region36: #{tpu_custom_call.1} parent=31 // pred_fallthru
          _
      $region32: #{tpu_custom_call.1} parent=5 // pred_fallthru
        _
      %p314 = scmp.le.s32.totalorder 2, %s12
      // Predicated region
      $region37: #{tpu_custom_call.1} parent=5 // pred_check
        %p315 = pneg %p314
      $region38: #{tpu_custom_call.1} parent=5 // pred_check_branch
        %317 = sbr.rel (%p315) target = $region40
      $region39: #{tpu_custom_call.1} parent=5 // pred_region
        %s318 = ssub.s32 %s12, 2
        // Predicated region
        $region41: #{tpu_custom_call.1} parent=39 // pred_check
          %p319 = pneg %p125
        $region42: #{tpu_custom_call.1} parent=39 // pred_check_branch
          %321 = sbr.rel (%p319) target = $region44
        $region43: #{tpu_custom_call.1} parent=39 // pred_region
          %s322 = sand.u32 %s110, 1
          %s323 = scalar_lea.sflag [#allocation3], %s322
          %s324 = sand.u32 %s110, 1
          %s325 = smul.addr %s324, 16
          %s326 = scalar_lea.vmem [#allocation2], %s325
          %327 = dma.done %s323, 256
        $region44: #{tpu_custom_call.1} parent=39 // pred_fallthru
          _
      $region40: #{tpu_custom_call.1} parent=5 // pred_fallthru
        _
    $region6: #{tpu_custom_call.1} parent=1 // loop_footer
      %s16 = sadd.s32 1, %s12
    $region7: #{tpu_custom_call.1} parent=1 // loop_footer_branch
      %11 = sbr.rel target = $region3
    $region8: #{tpu_custom_call.1} parent=1 // loop_exit
      _
    %328 = vsyncpa [#allocation3], 1
    %s329 = scalar_lea.sflag [#allocation3], 1
    %330 = vsyncpa %s329, 1

// kernel: tpu_custom_call.1
$region0: #{tpu_custom_call.1}
  #allocation0 [shape = 'u32[]', space=smem, size = 0x4, offset = 0x4, fixed_abs, tag = 'smem constant byte address 0x4 - core index']
  #allocation1 [shape = 'u32[144,128]{1,0:T(1,128)}', space=vmem, size = 0x12000, scoped, tag = 'internal scratch']
  %s0 = inlined_call_operand.vmem [shape: f32[2,4,256], index: 0, kind: input, shape index: {}]
  %s1 = inlined_call_operand.vmem [shape: f32[8,4], index: 1, kind: input, shape index: {}]
  %s2 = inlined_call_operand.vmem [shape: f32[8,1], index: 2, kind: input, shape index: {}]
  %s3 = inlined_call_operand.hbm [shape: f32[2,8,256], index: 3, kind: output, shape index: {}]
  %s4 = sld [smem:[#allocation0]]
  $region45: #{tpu_custom_call.1} parent=0
    _
  %s6 = ssub.s32 1, %s4
  %s7 = scalar_select 0, %s6, %s4
  $region1: #{tpu_custom_call.1} parent=0
    #allocation2 [shape = 'u8[16384]{0}', space=vmem, size = 0x4000, scoped, tag = 'output window, operand 0']
    #allocation3 [shape = 's32[2]{0}', space=sflag, size = 0x8, scoped, tag = 'scoped memory for tpu_custom_call.1']
    %8 = vsyncpa [#allocation3], 0
    %s9 = scalar_lea.sflag [#allocation3], 1
    %10 = vsyncpa %s9, 0
    loop: start=0, step=1, limit=4
    $region2: #{tpu_custom_call.1} parent=1 // loop_pre_header
      _
    $region3: #{tpu_custom_call.1} parent=1 // loop_header
      %s12 = sphi 0, %s16
      %p13 = scmp.ge.s32.totalorder %s12, 4
      %s19 = sphi 0, %s31
      %s20 = sphi 0, %s27
      %s21 = sphi 0, %s19
      %s22 = sphi 0, %s20
      %s23 = sphi 0, %s21
      %s24 = sphi 0, %s22
      %s36 = sphi 0, %s38
      %s39 = sphi 0, %s36
      %s40 = sphi 0, %s39
      %s56 = sphi 0, %s40
      %s60 = sphi 0, %s60
      %s62 = sphi 0, %s60
      %s63 = sphi 0, %s62
      %s77 = sphi 0, %s63
      %s81 = sphi 0, %s81
      %s83 = sphi 0, %s81
      %s84 = sphi 0, %s83
      %s98 = sphi 0, %s84
      %s106 = sphi 0, %s108
      %s109 = sphi 0, %s106
      %s110 = sphi 0, %s109
      %s126 = sphi 0, %s110
    $region4: #{tpu_custom_call.1} parent=1 // loop_header_branch
      %15 = sbr.rel (%p13) target = $region8
    $region5: #{tpu_custom_call.1} parent=1 // loop_body
      %s17 = ssub.s32 %s12, 1
      %s18 = ssub.s32 %s12, 2
      %s25 = sadd.s32 1, %s20
      %p26 = scmp.ge.s32.totalorder %s25, 1
      %s27 = scalar_select %p26, 0, %s25
      %s28 = sadd.s32 1, %s19
      %s29 = scalar_select %p26, %s28, %s19
      %p30 = scmp.ge.s32.totalorder %s29, 2
      %s31 = scalar_select %p30, 0, %s29
      %s32 = ssub.s32 %s19, %s31
      %s33 = ssub.s32 %s20, %s27
      %s34 = sor.u32 %s32, %s33
      %p35 = scmp.eq.s32.totalorder %s34, 0
      %s37 = sadd.s32 %s36, 1
      %s38 = scalar_select %p35, %s36, %s37
      %p41 = pneg %p35
      %p42 = scmp.eq.s32.totalorder %s12, 1
      %p43 = por %p41, %p42
      %p44 = scmp.ne.s32.totalorder %s36, %s39
      %p45 = scmp.eq.s32.totalorder %s12, 0
      %p46 = por %p44, %p45
      %p47 = scmp.ne.s32.totalorder %s36, %s39
      %p48 = scmp.eq.s32.totalorder %s17, 1
      %p49 = por %p47, %p48
      %p50 = scmp.ne.s32.totalorder %s39, %s40
      %p51 = scmp.eq.s32.totalorder %s17, 0
      %p52 = por %p50, %p51
      %p53 = scmp.ne.s32.totalorder %s39, %s40
      %p54 = scmp.eq.s32.totalorder %s18, 1
      %p55 = por %p53, %p54
      %p57 = scmp.ne.s32.totalorder %s40, %s56
      %p58 = scmp.eq.s32.totalorder %s18, 0
      %p59 = por %p57, %p58
      %s61 = sadd.s32 %s60, 1
      %p64 = scmp.eq.s32.totalorder %s12, 1
      %p65 = scmp.ne.s32.totalorder %s60, %s62
      %p66 = scmp.eq.s32.totalorder %s12, 0
      %p67 = por %p65, %p66
      %p68 = scmp.ne.s32.totalorder %s60, %s62
      %p69 = scmp.eq.s32.totalorder %s17, 1
      %p70 = por %p68, %p69
      %p71 = scmp.ne.s32.totalorder %s62, %s63
      %p72 = scmp.eq.s32.totalorder %s17, 0
      %p73 = por %p71, %p72
      %p74 = scmp.ne.s32.totalorder %s62, %s63
      %p75 = scmp.eq.s32.totalorder %s18, 1
      %p76 = por %p74, %p75
      %p78 = scmp.ne.s32.totalorder %s63, %s77
      %p79 = scmp.eq.s32.totalorder %s18, 0
      %p80 = por %p78, %p79
      %s82 = sadd.s32 %s81, 1
      %p85 = scmp.eq.s32.totalorder %s12, 1
      %p86 = scmp.ne.s32.totalorder %s81, %s83
      %p87 = scmp.eq.s32.totalorder %s12, 0
      %p88 = por %p86, %p87
      %p89 = scmp.ne.s32.totalorder %s81, %s83
      %p90 = scmp.eq.s32.totalorder %s17, 1
      %p91 = por %p89, %p90
      %p92 = scmp.ne.s32.totalorder %s83, %s84
      %p93 = scmp.eq.s32.totalorder %s17, 0
      %p94 = por %p92, %p93
      %p95 = scmp.ne.s32.totalorder %s83, %s84
      %p96 = scmp.eq.s32.totalorder %s18, 1
      %p97 = por %p95, %p96
      %p99 = scmp.ne.s32.totalorder %s84, %s98
      %p100 = scmp.eq.s32.totalorder %s18, 0
      %p101 = por %p99, %p100
      %s102 = ssub.s32 %s19, %s31
      %s103 = ssub.s32 %s20, %s27
      %s104 = sor.u32 %s102, %s103
      %p105 = scmp.eq.s32.totalorder %s104, 0
      %s107 = sadd.s32 %s106, 1
      %s108 = scalar_select %p105, %s106, %s107
      %p111 = pneg %p105
      %p112 = scmp.eq.s32.totalorder %s12, 1
      %p113 = por %p111, %p112
      %p114 = scmp.ne.s32.totalorder %s106, %s109
      %p115 = scmp.eq.s32.totalorder %s12, 0
      %p116 = por %p114, %p115
      %p117 = scmp.ne.s32.totalorder %s106, %s109
      %p118 = scmp.eq.s32.totalorder %s17, 1
      %p119 = por %p117, %p118
      %p120 = scmp.ne.s32.totalorder %s109, %s110
      %p121 = scmp.eq.s32.totalorder %s17, 0
      %p122 = por %p120, %p121
      %p123 = scmp.ne.s32.totalorder %s109, %s110
      %p124 = scmp.eq.s32.totalorder %s18, 1
      %p125 = por %p123, %p124
      %p127 = scmp.ne.s32.totalorder %s110, %s126
      %p128 = scmp.eq.s32.totalorder %s18, 0
      %p129 = por %p127, %p128
      %p130 = scmp.le.s32.totalorder 1, %s12
      %p131 = scmp.lt.s32.totalorder %s12, 3
      %p132 = pnand %p130, %p131
      %p133 = pneg %p132
      // Predicated region
      $region9: #{tpu_custom_call.1} parent=5 // pred_check
        _
      $region10: #{tpu_custom_call.1} parent=5 // pred_check_branch
        %135 = sbr.rel (%p132) target = $region12
      $region11: #{tpu_custom_call.1} parent=5 // pred_region
        %s136 = ssub.s32 %s12, 1
        // Predicated region
        $region13: #{tpu_custom_call.1} parent=11 // pred_check
          %p137 = pneg %p73
        $region14: #{tpu_custom_call.1} parent=11 // pred_check_branch
          %139 = sbr.rel (%p137) target = $region16
        $region15: #{tpu_custom_call.1} parent=11 // pred_region
          _
        $region16: #{tpu_custom_call.1} parent=11 // pred_fallthru
          _
        // Predicated region
        $region17: #{tpu_custom_call.1} parent=11 // pred_check
          %p140 = pneg %p94
        $region18: #{tpu_custom_call.1} parent=11 // pred_check_branch
          %142 = sbr.rel (%p140) target = $region20
        $region19: #{tpu_custom_call.1} parent=11 // pred_region
          _
        $region20: #{tpu_custom_call.1} parent=11 // pred_fallthru
          _
      $region12: #{tpu_custom_call.1} parent=5 // pred_fallthru
        _
      %p143 = scmp.lt.s32.totalorder %s12, 2
      // Predicated region
      $region21: #{tpu_custom_call.1} parent=5 // pred_check
        %p144 = pneg %p143
      $region22: #{tpu_custom_call.1} parent=5 // pred_check_branch
        %146 = sbr.rel (%p144) target = $region24
      $region23: #{tpu_custom_call.1} parent=5 // pred_region
        // Predicated region
        $region25: #{tpu_custom_call.1} parent=23 // pred_check
          %p147 = pneg %p46
        $region26: #{tpu_custom_call.1} parent=23 // pred_check_branch
          %149 = sbr.rel (%p147) target = $region28
        $region27: #{tpu_custom_call.1} parent=23 // pred_region
          %s150 = smul.u32 2, %s20
          %p151 = scmp.lt.s32.totalorder %s19, 1
          %s152 = scalar_select %p151, %s19, 1
          %p153 = scmp.lt.s32.totalorder %s150, 1
          %s154 = scalar_select %p153, %s150, 1
          %s155 = smul.addr %s152, 2
          %s156 = sadd.s32 %s154, %s155
          %s157 = smul.addr %s156, 4
          %s158 = scalar_lea.vmem %s0, %s157
          %s159 = smul.u32 2, %s20
        $region28: #{tpu_custom_call.1} parent=23 // pred_fallthru
          _
      $region24: #{tpu_custom_call.1} parent=5 // pred_fallthru
        _
      %p160 = scmp.le.s32.totalorder 1, %s12
      %p161 = scmp.lt.s32.totalorder %s12, 3
      %p162 = pnand %p160, %p161
      %p163 = pneg %p162
      // Predicated region
      $region29: #{tpu_custom_call.1} parent=5 // pred_check
        _
      $region30: #{tpu_custom_call.1} parent=5 // pred_check_branch
        %165 = sbr.rel (%p162) target = $region32
      $region31: #{tpu_custom_call.1} parent=5 // pred_region
        %s166 = ssub.s32 %s12, 1
        %s167 = smul.u32 2, %s22
        %p168 = scmp.lt.s32.totalorder %s21, 1
        %s169 = scalar_select %p168, %s21, 1
        %p170 = scmp.lt.s32.totalorder %s167, 1
        %s171 = scalar_select %p170, %s167, 1
        %s172 = smul.addr %s169, 2
        %s173 = sadd.s32 %s171, %s172
        %s174 = smul.addr %s173, 4
        %s175 = scalar_lea.vmem %s0, %s174
        %p176 = pneg %p52
        %p177 = pneg %p49
        %p178 = pneg %p73
        %p179 = pneg %p70
        %p180 = pneg %p94
        %p181 = pneg %p91
        %p182 = pneg %p122
        %p183 = pneg %p119
        %s184 = sand.u32 %s109, 1
        %s185 = scalar_lea.sflag [#allocation3], %s184
        %s186 = sand.u32 %s109, 1
        %s187 = smul.addr %s186, 16
        %s188 = scalar_lea.vmem [#allocation2], %s187
        %s189 = smul.u32 2, %s22
        %p190 = scmp.lt.s32.totalorder %s21, 1
        %s191 = scalar_select %p190, %s21, 1
        %p192 = scmp.lt.s32.totalorder %s189, 1
        %s193 = scalar_select %p192, %s189, 1
        %s194 = smul.addr %s191, 2
        %s195 = sadd.s32 %s193, %s194
        %s196 = smul.addr %s195, 4
        %s197 = scalar_lea.vmem %s0, %s196
        %s198 = smul.u32 2, %s22
        %s199 = smul.u32 2, %s22
        %v200 = vld [vmem:[%s1] sm:$0xff]
        %v201 = vld [vmem:[%s2] sm:$0xff]
        %v202 = vld [vmem:[%s197] sm:$0xff]
        %v203 = vmax.f32 %v202, 0.0
        %205 = vset.pattern.permute.xlu0 0
        %206 = vperm.xlu0 %205, %v201
        %v207 = vpop.permute.xlu0 %206
        %v210 = vcombine.high %v203, %v203
        %vm211 = vcmask 31744
        %v213 = vsel %vm211, %v200, 0
        %vm215 = vcmask 1043456
        %v216 = vsel %vm215, %v203, 0
        %v218 = vsel %vm215, %v210, 0
        %220 = vmatprep.subr.mxu0 0.0
        %221 = vmatpush1.msra.mxu0 0.0
        %222 = vmatprep.subr.mxu0 0.0
        %223 = vmatpush1.msra.mxu0 0.0
        %224 = vmatprep.subr.mxu0 0.0
        %225 = vmatpush1.msra.mxu0 0.0
        %226 = vmatprep.subr.mxu0 0.0
        %227 = vmatpush1.msra.mxu0 0.0
        %228 = vmatprep.subr.mxu0 0.0
        %229 = vmatpush1.msra.mxu0 0.0
        %230 = vmatprep.subr.mxu0 0.0
        %231 = vmatpush1.msra.mxu0 0.0
        %232 = vmatprep.subr.mxu0 0.0
        %233 = vmatpush1.msra.mxu0 0.0
        %234 = vmatprep.subr.mxu0 0.0
        %235 = vmatpush1.msra.mxu0 0.0
        %236 = vmatprep.subr.mxu0 0.0
        %237 = vmatpush1.msra.mxu0 0.0
        %238 = vmatprep.subr.mxu0 0.0
        %239 = vmatpush1.msra.mxu0 0.0
        %240 = vmatprep.subr.mxu0 0.0
        %241 = vmatpush1.msra.mxu0 0.0
        %242 = vmatprep.subr.mxu0 0.0
        %243 = vmatpush1.msra.mxu0 0.0
        %244 = vmatprep.subr.mxu0 0.0
        %245 = vmatpush1.msra.mxu0 0.0
        %246 = vmatprep.subr.mxu0 0.0
        %247 = vmatpush1.msra.mxu0 0.0
        %248 = vmatprep.subr.mxu0 0.0
        %249 = vmatpush1.msra.mxu0 0.0
        %250 = vmatprep.subr.mxu0 %v218
        %251 = vmatpush1.msra.mxu0 %v216
        %252 = vmatprep.subr.mxu0 0.0
        %253 = vmatpush2.msra.mxu0 0.0
        %254 = vmatprep.subr.mxu0 0.0
        %255 = vmatpush2.msra.mxu0 0.0
        %256 = vmatprep.subr.mxu0 0.0
        %257 = vmatpush2.msra.mxu0 0.0
        %258 = vmatprep.subr.mxu0 0.0
        %259 = vmatpush2.msra.mxu0 0.0
        %260 = vmatprep.subr.mxu0 0.0
        %261 = vmatpush2.msra.mxu0 0.0
        %262 = vmatprep.subr.mxu0 0.0
        %263 = vmatpush2.msra.mxu0 0.0
        %264 = vmatprep.subr.mxu0 0.0
        %265 = vmatpush2.msra.mxu0 0.0
        %266 = vmatprep.subr.mxu0 0.0
        %267 = vmatpush2.msra.mxu0 0.0
        %268 = vmatprep.subr.mxu0 0.0
        %269 = vmatpush2.msra.mxu0 0.0
        %270 = vmatprep.subr.mxu0 0.0
        %271 = vmatpush2.msra.mxu0 0.0
        %272 = vmatprep.subr.mxu0 0.0
        %273 = vmatpush2.msra.mxu0 0.0
        %274 = vmatprep.subr.mxu0 0.0
        %275 = vmatpush2.msra.mxu0 0.0
        %276 = vmatprep.subr.mxu0 0.0
        %277 = vmatpush2.msra.mxu0 0.0
        %278 = vmatprep.subr.mxu0 0.0
        %279 = vmatpush2.msra.mxu0 0.0
        %280 = vmatprep.subr.mxu0 0.0
        %281 = vmatpush2.msra.mxu0 0.0
        %282 = vmatprep.subr.mxu0 0.0
        %283 = vmatpush2.msra.mxu0 0.0
        %284 = vmatprep.mubr.f32.mxu0 0.0
        %285 = vmatmul.mubr.f32.gmra.mxu0 %v213
        %v286 = vpop.f32.mrf.mxu0
        %v287 = vadd.f32 %v207, %v286
        %v288 = vpop.f32.mrf.mxu0
        %v289 = vadd.f32 %v207, %v288
        %290 = vdwg.mxu0
        %291 = vst [vmem:[%s188] sm:$0xff] %v287
        %292 = vst [vmem:[%s188 + $0x8] sm:$0xff] %v289
        %s293 = sand.u32 %s109, 1
        %s294 = scalar_lea.sflag [#allocation3], %s293
        %s295 = sand.u32 %s109, 1
        %s296 = smul.addr %s295, 16
        %s297 = scalar_lea.vmem [#allocation2], %s296
        // Predicated region
        $region33: #{tpu_custom_call.1} parent=31 // pred_check
          %p298 = pneg %p119
        $region34: #{tpu_custom_call.1} parent=31 // pred_check_branch
          %300 = sbr.rel (%p298) target = $region36
        $region35: #{tpu_custom_call.1} parent=31 // pred_region
          %s301 = smul.u32 2, %s22
          %s303 = ssub.s32 256, 256
          %304 = vsyncadd %s294, %s303
          %s305 = smul.addr %s21, 2
          %s306 = sadd.s32 %s301, %s305
          %s307 = smul.addr %s306, 128
          %s308 = scalar_lea.hbm %s3, %s307
          %s310 = sshll.u32 %s297, 4
          %s311 = int_to_ptr.vmem [resolvable:$true] %s310
          %313 = dma.vmem_to_hbm [thread:$0]  %s311, 256, %s308, %s294
        $region36: #{tpu_custom_call.1} parent=31 // pred_fallthru
          _
      $region32: #{tpu_custom_call.1} parent=5 // pred_fallthru
        _
      %p314 = scmp.le.s32.totalorder 2, %s12
      // Predicated region
      $region37: #{tpu_custom_call.1} parent=5 // pred_check
        %p315 = pneg %p314
      $region38: #{tpu_custom_call.1} parent=5 // pred_check_branch
        %317 = sbr.rel (%p315) target = $region40
      $region39: #{tpu_custom_call.1} parent=5 // pred_region
        %s318 = ssub.s32 %s12, 2
        // Predicated region
        $region41: #{tpu_custom_call.1} parent=39 // pred_check
          %p319 = pneg %p125
        $region42: #{tpu_custom_call.1} parent=39 // pred_check_branch
          %321 = sbr.rel (%p319) target = $region44
        $region43: #{tpu_custom_call.1} parent=39 // pred_region
          %s322 = sand.u32 %s110, 1
          %s323 = scalar_lea.sflag [#allocation3], %s322
          %s324 = sand.u32 %s110, 1
          %s325 = smul.addr %s324, 16
          %s326 = scalar_lea.vmem [#allocation2], %s325
          %327 = dma.done %s323, 256
        $region44: #{tpu_custom_call.1} parent=39 // pred_fallthru
          _
      $region40: #{tpu_custom_call.1} parent=5 // pred_fallthru
        _
    $region6: #{tpu_custom_call.1} parent=1 // loop_footer
      %s16 = sadd.s32 1, %s12
    $region7: #{tpu_custom_call.1} parent=1 // loop_footer_branch
      %11 = sbr.rel target = $region3
    $region8: #{tpu_custom_call.1} parent=1 // loop_exit
      _
    %328 = vsyncpa [#allocation3], 1
    %s329 = scalar_lea.sflag [#allocation3], 1
    %330 = vsyncpa %s329, 1

</llo_original>
